<compile_context>
chip_gen: v7x
topology: tpu7x:2x2x1
jax: 0.10.0
libtpu: 0.0.40
codegen_flags: <defaults>
</compile_context>

<pallas_src>
import jax
import jax.numpy as jnp
from jax.experimental import pallas as pl
from jax.experimental.pallas import tpu as pltpu


def basic_block_kernel(x_ref, t1_ref, t2_ref, s1_ref, b1_ref, s2_ref, b2_ref,
                       out_ref):
    # x_ref  : (H, W*Cin)          f32  flattened input rows, one batch item
    # t*_ref : (3, W*Cin, W*Cout)  bf16 block-Toeplitz conv weights (per kh)
    # s*/b*  : (1, W*Cout)         f32  folded BatchNorm scale / bias (tiled over W)
    # out_ref: (H, W*Cout)         f32
    H = x_ref.shape[0]
    wc_in = x_ref.shape[1]
    wc_out = t1_ref.shape[-1]

    x_f32 = x_ref[...]                       # kept in f32 for the residual add

    def conv_rows(a_f32, t_ref, wc):
        # 3x3 conv (pad=1, stride=1) as 3 row-shifted block-Toeplitz matmuls:
        #   out[h] = a[h-1] @ T[0] + a[h] @ T[1] + a[h+1] @ T[2]
        # with zero rows outside [0, H) — the spatial pad, done in-kernel.
        # Shifts are built in f32 (cheap sublane concat) then cast to bf16 so
        # the MXU runs its native bf16 path; accumulation stays f32.
        zrow = jnp.zeros((1, wc), jnp.float32)
        a_mid = a_f32.astype(jnp.bfloat16)
        a_dn = jnp.concatenate([zrow, a_f32[:H - 1]], axis=0).astype(jnp.bfloat16)
        a_up = jnp.concatenate([a_f32[1:], zrow], axis=0).astype(jnp.bfloat16)
        return (jnp.dot(a_dn, t_ref[0], preferred_element_type=jnp.float32)
                + jnp.dot(a_mid, t_ref[1], preferred_element_type=jnp.float32)
                + jnp.dot(a_up, t_ref[2], preferred_element_type=jnp.float32))

    # conv1 -> bn1 -> relu      (BN folded into per-channel scale/bias, f32)
    acc1 = conv_rows(x_f32, t1_ref, wc_in)
    act1 = jnp.maximum(acc1 * s1_ref[...] + b1_ref[...], 0.0)

    # conv2 -> bn2 -> +residual -> relu.  Identity shortcut (stride=1,
    # downsample=None) means Cin == Cout, so the flattened residual layout
    # matches the output layout exactly.
    acc2 = conv_rows(act1, t2_ref, wc_out)
    out_ref[...] = jnp.maximum(acc2 * s2_ref[...] + b2_ref[...] + x_f32, 0.0)


def basic_block_forward(x_nchw, params):
    """x_nchw: (B, C, H, W) float32 -> (B, C, H, W) float32."""
    B, C, H, W = x_nchw.shape
    wc_in = W * C
    wc_out = params["s1"].shape[-1]
    Cout = wc_out // W

    # NCHW -> flattened (B, H, W*C) rows (channels fastest on the lane axis).
    x_rows = jnp.transpose(x_nchw, (0, 2, 3, 1)).reshape(B, H, wc_in)
    x_rows = x_rows.astype(jnp.float32)

    out_rows = pl.pallas_call(
        basic_block_kernel,
        out_shape=jax.ShapeDtypeStruct((B, H, wc_out), jnp.float32),
        grid=(B,),
        in_specs=[
            pl.BlockSpec((None, H, wc_in), lambda b: (b, 0, 0)),
            pl.BlockSpec((3, wc_in, wc_out), lambda b: (0, 0, 0)),
            pl.BlockSpec((3, wc_out, wc_out), lambda b: (0, 0, 0)),
            pl.BlockSpec((1, wc_out), lambda b: (0, 0)),
            pl.BlockSpec((1, wc_out), lambda b: (0, 0)),
            pl.BlockSpec((1, wc_out), lambda b: (0, 0)),
            pl.BlockSpec((1, wc_out), lambda b: (0, 0)),
        ],
        out_specs=pl.BlockSpec((None, H, wc_out), lambda b: (b, 0, 0)),
        compiler_params=pltpu.CompilerParams(
            dimension_semantics=("parallel",),          # megacore on v7x
            vmem_limit_bytes=32 * 1024 * 1024),
    )(x_rows, params["t1"], params["t2"], params["s1"], params["b1"],
      params["s2"], params["b2"])

    out_nhwc = out_rows.reshape(B, H, W, Cout)
    return jnp.transpose(out_nhwc, (0, 3, 1, 2))


# ---------------- parameter setup (deterministic, synthetic) ----------------

def init_raw_params(key, inplanes, planes):
    ks = jax.random.split(key, 10)
    raw = {
        "w1": jax.random.normal(ks[0], (planes, inplanes, 3, 3), jnp.float32) * 0.1,  # OIHW
        "w2": jax.random.normal(ks[1], (planes, planes, 3, 3), jnp.float32) * 0.1,    # OIHW
        "g1": jax.random.uniform(ks[2], (planes,), jnp.float32, 0.5, 1.5),
        "be1": jax.random.normal(ks[3], (planes,), jnp.float32) * 0.1,
        "m1": jax.random.normal(ks[4], (planes,), jnp.float32) * 0.1,
        "v1": jax.random.uniform(ks[5], (planes,), jnp.float32, 0.5, 1.5),
        "g2": jax.random.uniform(ks[6], (planes,), jnp.float32, 0.5, 1.5),
        "be2": jax.random.normal(ks[7], (planes,), jnp.float32) * 0.1,
        "m2": jax.random.normal(ks[8], (planes,), jnp.float32) * 0.1,
        "v2": jax.random.uniform(ks[9], (planes,), jnp.float32, 0.5, 1.5),
    }
    return raw


def fold_params(raw, width, eps=1e-5):
    """Fold BN into scale/bias and lower 3x3 convs to block-Toeplitz bf16 mats."""

    def lower_conv3x3(w_oihw):
        # OIHW (Cout, Cin, 3, 3) -> (3, W*Cin, W*Cout):
        #   T[kh][wi*Cin + ci, wo*Cout + co] = w[co, ci, kh, wi - wo + 1]
        # (zero where the kw index falls outside [0, 3) — the width pad).
        cout, cin, n_kh, n_kw = w_oihw.shape
        w_hwio = jnp.transpose(w_oihw, (2, 3, 1, 0))        # (3, 3, Cin, Cout)
        t = jnp.zeros((n_kh, width * cin, width * cout), jnp.float32)
        for wo in range(width):
            for kw in range(n_kw):
                wi = wo + kw - 1
                if 0 <= wi < width:
                    t = t.at[:, wi * cin:(wi + 1) * cin,
                             wo * cout:(wo + 1) * cout].set(w_hwio[:, kw])
        return t.astype(jnp.bfloat16)                       # bf16 MXU path

    def fold_bn(gamma, beta, mean, var):
        scale = gamma / jnp.sqrt(var + eps)
        bias = beta - mean * scale
        # tile per-channel params across W so they broadcast against the
        # flattened (H, W*C) activation slab
        return jnp.tile(scale, width)[None, :], jnp.tile(bias, width)[None, :]

    s1, b1 = fold_bn(raw["g1"], raw["be1"], raw["m1"], raw["v1"])
    s2, b2 = fold_bn(raw["g2"], raw["be2"], raw["m2"], raw["v2"])
    return {"t1": lower_conv3x3(raw["w1"]), "t2": lower_conv3x3(raw["w2"]),
            "s1": s1, "b1": b1, "s2": s2, "b2": b2}


# ---------------- pure-JAX reference (NCHW, mirrors PyTorch) ----------------

def reference_forward(x, raw, eps=1e-5):
    def conv(x, w):
        return jax.lax.conv_general_dilated(
            x, w, (1, 1), ((1, 1), (1, 1)),
            dimension_numbers=("NCHW", "OIHW", "NCHW"),
            precision=jax.lax.Precision.HIGHEST)

    def bn(x, g, b, m, v):
        g, b, m, v = (a[None, :, None, None] for a in (g, b, m, v))
        return (x - m) / jnp.sqrt(v + eps) * g + b

    out = jax.nn.relu(bn(conv(x, raw["w1"]), raw["g1"], raw["be1"], raw["m1"], raw["v1"]))
    out = bn(conv(out, raw["w2"]), raw["g2"], raw["be2"], raw["m2"], raw["v2"])
    return jax.nn.relu(out + x)


if __name__ == "__main__":
    B, C, H, W = 2, 4, 16, 16          # inplanes = planes = 4, stride = 1
    key = jax.random.PRNGKey(0)
    kx, kp = jax.random.split(key)

    x = jax.random.normal(kx, (B, C, H, W), jnp.float32)
    raw = init_raw_params(kp, C, C)
    params = fold_params(raw, W)

    out = jax.block_until_ready(basic_block_forward(x, params))
    ref = jax.block_until_ready(reference_forward(x, raw))

    assert out.shape == (B, C, H, W), out.shape
    # bf16 matmul inputs (per perf guidance) -> tolerance relaxed vs pure f32;
    # accumulation, BN and the residual add are still exact f32.
    if not jnp.allclose(out, ref, atol=3e-2, rtol=3e-2):
        raise AssertionError(
            f"mismatch: max abs err = {float(jnp.max(jnp.abs(out - ref)))}")

    print("KERNEL_OK")
</pallas_src>

<mosaic_0001>
module attributes {stable_mosaic.version = 11 : i64} {
  func.func @basic_block_kernel(%arg0: i32, %arg1: memref<1x16x64xf32, #tpu.memory_space<vmem>>, %arg2: memref<3x64x64xbf16, #tpu.memory_space<vmem>>, %arg3: memref<3x64x64xbf16, #tpu.memory_space<vmem>>, %arg4: memref<1x64xf32, #tpu.memory_space<vmem>>, %arg5: memref<1x64xf32, #tpu.memory_space<vmem>>, %arg6: memref<1x64xf32, #tpu.memory_space<vmem>>, %arg7: memref<1x64xf32, #tpu.memory_space<vmem>>, %arg8: memref<1x16x64xf32, #tpu.memory_space<vmem>>) attributes {dimension_semantics = [#tpu.dimension_semantics<parallel>], iteration_bounds = array<i64: 2>, scalar_prefetch = 0 : i64, scratch_operands = 0 : i64, tpu.core_type = #tpu.core_type<tc>, window_params = [{transform_indices = @transform_0, window_bounds = array<i64: 1, 16, 64>}, {pipeline_mode = #tpu.pipeline_mode<synchronous>, transform_indices = @transform_1, window_bounds = array<i64: 3, 64, 64>}, {pipeline_mode = #tpu.pipeline_mode<synchronous>, transform_indices = @transform_2, window_bounds = array<i64: 3, 64, 64>}, {pipeline_mode = #tpu.pipeline_mode<synchronous>, transform_indices = @transform_3, window_bounds = array<i64: 1, 64>}, {pipeline_mode = #tpu.pipeline_mode<synchronous>, transform_indices = @transform_4, window_bounds = array<i64: 1, 64>}, {pipeline_mode = #tpu.pipeline_mode<synchronous>, transform_indices = @transform_5, window_bounds = array<i64: 1, 64>}, {pipeline_mode = #tpu.pipeline_mode<synchronous>, transform_indices = @transform_6, window_bounds = array<i64: 1, 64>}, {transform_indices = @transform_7, window_bounds = array<i64: 1, 16, 64>}]} {
    %c0 = arith.constant 0 : index
    %c0_0 = arith.constant 0 : index
    %c0_1 = arith.constant 0 : index
    %0 = vector.load %arg1[%c0, %c0_0, %c0_1] : memref<1x16x64xf32, #tpu.memory_space<vmem>>, vector<1x16x64xf32>
    %1 = vector.shape_cast %0 : vector<1x16x64xf32> to vector<16x64xf32>
    %cst = arith.constant 0.000000e+00 : f32
    %2 = vector.broadcast %cst : f32 to vector<1x64xf32>
    %3 = arith.truncf %1 : vector<16x64xf32> to vector<16x64xbf16>
    %4 = vector.extract_strided_slice %1 {offsets = [0, 0], sizes = [15, 64], strides = [1, 1]} : vector<16x64xf32> to vector<15x64xf32>
    %5 = tpu.concatenate %2, %4 in 0 : vector<1x64xf32>, vector<15x64xf32> -> vector<16x64xf32>
    %6 = arith.truncf %5 : vector<16x64xf32> to vector<16x64xbf16>
    %7 = vector.extract_strided_slice %1 {offsets = [1, 0], sizes = [15, 64], strides = [1, 1]} : vector<16x64xf32> to vector<15x64xf32>
    %8 = tpu.concatenate %7, %2 in 0 : vector<15x64xf32>, vector<1x64xf32> -> vector<16x64xf32>
    %9 = arith.truncf %8 : vector<16x64xf32> to vector<16x64xbf16>
    %c0_2 = arith.constant 0 : index
    %c0_3 = arith.constant 0 : index
    %c0_4 = arith.constant 0 : index
    %10 = vector.load %arg2[%c0_2, %c0_3, %c0_4] : memref<3x64x64xbf16, #tpu.memory_space<vmem>>, vector<1x64x64xbf16>
    %11 = vector.shape_cast %10 : vector<1x64x64xbf16> to vector<64x64xbf16>
    %cst_5 = arith.constant dense<0.000000e+00> : vector<16x64xf32>
    %12 = tpu.matmul %6, %11, %cst_5 {dimension_numbers = #tpu.dot_dimension_numbers<[1], [0], [0], [1], [0, 0, 1, 1], [], []>} : vector<16x64xbf16>, vector<64x64xbf16>, vector<16x64xf32> -> vector<16x64xf32>
    %c1 = arith.constant 1 : index
    %c0_6 = arith.constant 0 : index
    %c0_7 = arith.constant 0 : index
    %13 = vector.load %arg2[%c1, %c0_6, %c0_7] : memref<3x64x64xbf16, #tpu.memory_space<vmem>>, vector<1x64x64xbf16>
    %14 = vector.shape_cast %13 : vector<1x64x64xbf16> to vector<64x64xbf16>
    %cst_8 = arith.constant dense<0.000000e+00> : vector<16x64xf32>
    %15 = tpu.matmul %3, %14, %cst_8 {dimension_numbers = #tpu.dot_dimension_numbers<[1], [0], [0], [1], [0, 0, 1, 1], [], []>} : vector<16x64xbf16>, vector<64x64xbf16>, vector<16x64xf32> -> vector<16x64xf32>
    %16 = arith.addf %12, %15 : vector<16x64xf32>
    %c2 = arith.constant 2 : index
    %c0_9 = arith.constant 0 : index
    %c0_10 = arith.constant 0 : index
    %17 = vector.load %arg2[%c2, %c0_9, %c0_10] : memref<3x64x64xbf16, #tpu.memory_space<vmem>>, vector<1x64x64xbf16>
    %18 = vector.shape_cast %17 : vector<1x64x64xbf16> to vector<64x64xbf16>
    %cst_11 = arith.constant dense<0.000000e+00> : vector<16x64xf32>
    %19 = tpu.matmul %9, %18, %cst_11 {dimension_numbers = #tpu.dot_dimension_numbers<[1], [0], [0], [1], [0, 0, 1, 1], [], []>} : vector<16x64xbf16>, vector<64x64xbf16>, vector<16x64xf32> -> vector<16x64xf32>
    %20 = arith.addf %16, %19 : vector<16x64xf32>
    %c0_12 = arith.constant 0 : index
    %c0_13 = arith.constant 0 : index
    %21 = vector.load %arg4[%c0_12, %c0_13] : memref<1x64xf32, #tpu.memory_space<vmem>>, vector<1x64xf32>
    %22 = vector.broadcast %21 : vector<1x64xf32> to vector<16x64xf32>
    %23 = arith.mulf %20, %22 : vector<16x64xf32>
    %c0_14 = arith.constant 0 : index
    %c0_15 = arith.constant 0 : index
    %24 = vector.load %arg5[%c0_14, %c0_15] : memref<1x64xf32, #tpu.memory_space<vmem>>, vector<1x64xf32>
    %25 = vector.broadcast %24 : vector<1x64xf32> to vector<16x64xf32>
    %26 = arith.addf %23, %25 : vector<16x64xf32>
    %cst_16 = arith.constant 0.000000e+00 : f32
    %27 = vector.broadcast %cst_16 : f32 to vector<16x64xf32>
    %28 = arith.maximumf %26, %27 : vector<16x64xf32>
    %cst_17 = arith.constant 0.000000e+00 : f32
    %29 = vector.broadcast %cst_17 : f32 to vector<1x64xf32>
    %30 = arith.truncf %28 : vector<16x64xf32> to vector<16x64xbf16>
    %31 = vector.extract_strided_slice %28 {offsets = [0, 0], sizes = [15, 64], strides = [1, 1]} : vector<16x64xf32> to vector<15x64xf32>
    %32 = tpu.concatenate %29, %31 in 0 : vector<1x64xf32>, vector<15x64xf32> -> vector<16x64xf32>
    %33 = arith.truncf %32 : vector<16x64xf32> to vector<16x64xbf16>
    %34 = vector.extract_strided_slice %28 {offsets = [1, 0], sizes = [15, 64], strides = [1, 1]} : vector<16x64xf32> to vector<15x64xf32>
    %35 = tpu.concatenate %34, %29 in 0 : vector<15x64xf32>, vector<1x64xf32> -> vector<16x64xf32>
    %36 = arith.truncf %35 : vector<16x64xf32> to vector<16x64xbf16>
    %c0_18 = arith.constant 0 : index
    %c0_19 = arith.constant 0 : index
    %c0_20 = arith.constant 0 : index
    %37 = vector.load %arg3[%c0_18, %c0_19, %c0_20] : memref<3x64x64xbf16, #tpu.memory_space<vmem>>, vector<1x64x64xbf16>
    %38 = vector.shape_cast %37 : vector<1x64x64xbf16> to vector<64x64xbf16>
    %cst_21 = arith.constant dense<0.000000e+00> : vector<16x64xf32>
    %39 = tpu.matmul %33, %38, %cst_21 {dimension_numbers = #tpu.dot_dimension_numbers<[1], [0], [0], [1], [0, 0, 1, 1], [], []>} : vector<16x64xbf16>, vector<64x64xbf16>, vector<16x64xf32> -> vector<16x64xf32>
    %c1_22 = arith.constant 1 : index
    %c0_23 = arith.constant 0 : index
    %c0_24 = arith.constant 0 : index
    %40 = vector.load %arg3[%c1_22, %c0_23, %c0_24] : memref<3x64x64xbf16, #tpu.memory_space<vmem>>, vector<1x64x64xbf16>
    %41 = vector.shape_cast %40 : vector<1x64x64xbf16> to vector<64x64xbf16>
    %cst_25 = arith.constant dense<0.000000e+00> : vector<16x64xf32>
    %42 = tpu.matmul %30, %41, %cst_25 {dimension_numbers = #tpu.dot_dimension_numbers<[1], [0], [0], [1], [0, 0, 1, 1], [], []>} : vector<16x64xbf16>, vector<64x64xbf16>, vector<16x64xf32> -> vector<16x64xf32>
    %43 = arith.addf %39, %42 : vector<16x64xf32>
    %c2_26 = arith.constant 2 : index
    %c0_27 = arith.constant 0 : index
    %c0_28 = arith.constant 0 : index
    %44 = vector.load %arg3[%c2_26, %c0_27, %c0_28] : memref<3x64x64xbf16, #tpu.memory_space<vmem>>, vector<1x64x64xbf16>
    %45 = vector.shape_cast %44 : vector<1x64x64xbf16> to vector<64x64xbf16>
    %cst_29 = arith.constant dense<0.000000e+00> : vector<16x64xf32>
    %46 = tpu.matmul %36, %45, %cst_29 {dimension_numbers = #tpu.dot_dimension_numbers<[1], [0], [0], [1], [0, 0, 1, 1], [], []>} : vector<16x64xbf16>, vector<64x64xbf16>, vector<16x64xf32> -> vector<16x64xf32>
    %47 = arith.addf %43, %46 : vector<16x64xf32>
    %c0_30 = arith.constant 0 : index
    %c0_31 = arith.constant 0 : index
    %48 = vector.load %arg6[%c0_30, %c0_31] : memref<1x64xf32, #tpu.memory_space<vmem>>, vector<1x64xf32>
    %49 = vector.broadcast %48 : vector<1x64xf32> to vector<16x64xf32>
    %50 = arith.mulf %47, %49 : vector<16x64xf32>
    %c0_32 = arith.constant 0 : index
    %c0_33 = arith.constant 0 : index
    %51 = vector.load %arg7[%c0_32, %c0_33] : memref<1x64xf32, #tpu.memory_space<vmem>>, vector<1x64xf32>
    %52 = vector.broadcast %51 : vector<1x64xf32> to vector<16x64xf32>
    %53 = arith.addf %50, %52 : vector<16x64xf32>
    %54 = arith.addf %53, %1 : vector<16x64xf32>
    %cst_34 = arith.constant 0.000000e+00 : f32
    %55 = vector.broadcast %cst_34 : f32 to vector<16x64xf32>
    %56 = arith.maximumf %54, %55 : vector<16x64xf32>
    %c0_35 = arith.constant 0 : index
    %c0_36 = arith.constant 0 : index
    %c0_37 = arith.constant 0 : index
    %57 = vector.load %arg8[%c0_35, %c0_36, %c0_37] : memref<1x16x64xf32, #tpu.memory_space<vmem>>, vector<1x16x64xf32>
    %58 = vector.shape_cast %57 : vector<1x16x64xf32> to vector<16x64xf32>
    %59 = vector.shape_cast %56 : vector<16x64xf32> to vector<1x16x64xf32>
    tpu.vector_store %arg8[%c0_35, %c0_36, %c0_37], %59 {strides = array<i32>} : memref<1x16x64xf32, #tpu.memory_space<vmem>>, vector<1x16x64xf32>,
    return
  }
  func.func @transform_0(%arg0: i32) -> (i32, i32, i32) {
    %c0_i32 = arith.constant 0 : i32
    %c0_i32_0 = arith.constant 0 : i32
    %c0_i32_1 = arith.constant 0 : i32
    return %arg0, %c0_i32, %c0_i32_0 : i32, i32, i32
  }
  func.func @transform_1(%arg0: i32) -> (i32, i32, i32) {
    %c0_i32 = arith.constant 0 : i32
    %c0_i32_0 = arith.constant 0 : i32
    %c0_i32_1 = arith.constant 0 : i32
    %c0_i32_2 = arith.constant 0 : i32
    return %c0_i32, %c0_i32_0, %c0_i32_1 : i32, i32, i32
  }
  func.func @transform_2(%arg0: i32) -> (i32, i32, i32) {
    %c0_i32 = arith.constant 0 : i32
    %c0_i32_0 = arith.constant 0 : i32
    %c0_i32_1 = arith.constant 0 : i32
    %c0_i32_2 = arith.constant 0 : i32
    return %c0_i32, %c0_i32_0, %c0_i32_1 : i32, i32, i32
  }
  func.func @transform_3(%arg0: i32) -> (i32, i32) {
    %c0_i32 = arith.constant 0 : i32
    %c0_i32_0 = arith.constant 0 : i32
    %c0_i32_1 = arith.constant 0 : i32
    return %c0_i32, %c0_i32_0 : i32, i32
  }
  func.func @transform_4(%arg0: i32) -> (i32, i32) {
    %c0_i32 = arith.constant 0 : i32
    %c0_i32_0 = arith.constant 0 : i32
    %c0_i32_1 = arith.constant 0 : i32
    return %c0_i32, %c0_i32_0 : i32, i32
  }
  func.func @transform_5(%arg0: i32) -> (i32, i32) {
    %c0_i32 = arith.constant 0 : i32
    %c0_i32_0 = arith.constant 0 : i32
    %c0_i32_1 = arith.constant 0 : i32
    return %c0_i32, %c0_i32_0 : i32, i32
  }
  func.func @transform_6(%arg0: i32) -> (i32, i32) {
    %c0_i32 = arith.constant 0 : i32
    %c0_i32_0 = arith.constant 0 : i32
    %c0_i32_1 = arith.constant 0 : i32
    return %c0_i32, %c0_i32_0 : i32, i32
  }
  func.func @transform_7(%arg0: i32) -> (i32, i32, i32) {
    %c0_i32 = arith.constant 0 : i32
    %c0_i32_0 = arith.constant 0 : i32
    %c0_i32_1 = arith.constant 0 : i32
    return %arg0, %c0_i32, %c0_i32_0 : i32, i32, i32
  }
}

</mosaic_0001>

<llo_original>
// kernel: tpu_custom_call.1
$region0: #{tpu_custom_call.1}
  #allocation0 [shape = 'u32[]', space=smem, size = 0x4, offset = 0x4, fixed_abs, tag = 'smem constant byte address 0x4 - core index']
  #allocation1 [shape = 'u32[144,128]{1,0:T(1,128)}', space=vmem, size = 0x12000, scoped, tag = 'internal scratch']
  %s0 = inlined_call_operand.hbm [shape: f32[2,16,64], index: 0, kind: input, shape index: {}]
  %s1 = inlined_call_operand.hbm [shape: bf16[3,64,64], index: 1, kind: input, shape index: {}]
  %s2 = inlined_call_operand.hbm [shape: bf16[3,64,64], index: 2, kind: input, shape index: {}]
  %s3 = inlined_call_operand.vmem [shape: f32[1,64], index: 3, kind: input, shape index: {}]
  %s4 = inlined_call_operand.vmem [shape: f32[1,64], index: 4, kind: input, shape index: {}]
  %s5 = inlined_call_operand.vmem [shape: f32[1,64], index: 5, kind: input, shape index: {}]
  %s6 = inlined_call_operand.vmem [shape: f32[1,64], index: 6, kind: input, shape index: {}]
  %s7 = inlined_call_operand.hbm [shape: f32[2,16,64], index: 7, kind: output, shape index: {}]
  %s8 = sld [smem:[#allocation0]]
  $region73: #{tpu_custom_call.1} parent=0
    _
  %s10 = ssub.s32 1, %s8
  %s11 = scalar_select 0, %s10, %s8
  $region1: #{tpu_custom_call.1} parent=0
    #allocation2 [shape = 'u8[16384]{0}', space=vmem, size = 0x4000, scoped, tag = 'input window, operand 0']
    #allocation3 [shape = 's32[2]{0}', space=sflag, size = 0x8, scoped, tag = 'scoped memory for tpu_custom_call.1']
    #allocation4 [shape = 's32[2]{0}', space=sflag, size = 0x8, scoped, tag = 'scoped memory for tpu_custom_call.1']
    #allocation5 [shape = 'u8[49152]{0}', space=vmem, size = 0xc000, scoped, tag = 'input window, operand 1, single buffered']
    #allocation6 [shape = 's32[1]{0}', space=sflag, size = 0x4, scoped, tag = 'scoped memory for tpu_custom_call.1']
    #allocation7 [shape = 'u8[49152]{0}', space=vmem, size = 0xc000, scoped, tag = 'input window, operand 2, single buffered']
    #allocation8 [shape = 'u8[16384]{0}', space=vmem, size = 0x4000, scoped, tag = 'output window, operand 0']
    %12 = vsyncpa [#allocation3], 0
    %s13 = scalar_lea.sflag [#allocation3], 1
    %14 = vsyncpa %s13, 0
    %15 = vsyncpa [#allocation6], 0
    %16 = vsyncpa [#allocation4], 0
    %s17 = scalar_lea.sflag [#allocation4], 1
    %18 = vsyncpa %s17, 0
    loop: start=0, step=1, limit=4
    $region2: #{tpu_custom_call.1} parent=1 // loop_pre_header
      _
    $region3: #{tpu_custom_call.1} parent=1 // loop_header
      %s20 = sphi 0, %s24
      %p21 = scmp.ge.s32.totalorder %s20, 4
      %s30 = sphi 0, %s32
      %s33 = sphi 0, %s30
      %s34 = sphi 0, %s33
      %s50 = sphi 0, %s34
      %s54 = sphi 0, %s54
      %s56 = sphi 0, %s54
      %s57 = sphi 0, %s56
      %s71 = sphi 0, %s57
      %s75 = sphi 0, %s75
      %s77 = sphi 0, %s75
      %s78 = sphi 0, %s77
      %s92 = sphi 0, %s78
      %s96 = sphi 0, %s96
      %s98 = sphi 0, %s96
      %s99 = sphi 0, %s98
      %s113 = sphi 0, %s99
      %s117 = sphi 0, %s117
      %s119 = sphi 0, %s117
      %s120 = sphi 0, %s119
      %s134 = sphi 0, %s120
      %s138 = sphi 0, %s138
      %s140 = sphi 0, %s138
      %s141 = sphi 0, %s140
      %s155 = sphi 0, %s141
      %s159 = sphi 0, %s159
      %s161 = sphi 0, %s159
      %s162 = sphi 0, %s161
      %s176 = sphi 0, %s162
      %s182 = sphi 0, %s184
      %s185 = sphi 0, %s182
      %s186 = sphi 0, %s185
      %s202 = sphi 0, %s186
    $region4: #{tpu_custom_call.1} parent=1 // loop_header_branch
      %23 = sbr.rel (%p21) target = $region8
    $region5: #{tpu_custom_call.1} parent=1 // loop_body
      %s25 = ssub.s32 %s20, 1
      %s26 = ssub.s32 %s20, 2
      %s27 = sadd.s32 %s20, 1
      %s28 = ssub.s32 %s20, %s27
      %p29 = scmp.eq.s32.totalorder %s28, 0
      %s31 = sadd.s32 %s30, 1
      %s32 = scalar_select %p29, %s30, %s31
      %p35 = pneg %p29
      %p36 = scmp.eq.s32.totalorder %s20, 1
      %p37 = por %p35, %p36
      %p38 = scmp.ne.s32.totalorder %s30, %s33
      %p39 = scmp.eq.s32.totalorder %s20, 0
      %p40 = por %p38, %p39
      %p41 = scmp.ne.s32.totalorder %s30, %s33
      %p42 = scmp.eq.s32.totalorder %s25, 1
      %p43 = por %p41, %p42
      %p44 = scmp.ne.s32.totalorder %s33, %s34
      %p45 = scmp.eq.s32.totalorder %s25, 0
      %p46 = por %p44, %p45
      %p47 = scmp.ne.s32.totalorder %s33, %s34
      %p48 = scmp.eq.s32.totalorder %s26, 1
      %p49 = por %p47, %p48
      %p51 = scmp.ne.s32.totalorder %s34, %s50
      %p52 = scmp.eq.s32.totalorder %s26, 0
      %p53 = por %p51, %p52
      %s55 = sadd.s32 %s54, 1
      %p58 = scmp.eq.s32.totalorder %s20, 1
      %p59 = scmp.ne.s32.totalorder %s54, %s56
      %p60 = scmp.eq.s32.totalorder %s20, 0
      %p61 = por %p59, %p60
      %p62 = scmp.ne.s32.totalorder %s54, %s56
      %p63 = scmp.eq.s32.totalorder %s25, 1
      %p64 = por %p62, %p63
      %p65 = scmp.ne.s32.totalorder %s56, %s57
      %p66 = scmp.eq.s32.totalorder %s25, 0
      %p67 = por %p65, %p66
      %p68 = scmp.ne.s32.totalorder %s56, %s57
      %p69 = scmp.eq.s32.totalorder %s26, 1
      %p70 = por %p68, %p69
      %p72 = scmp.ne.s32.totalorder %s57, %s71
      %p73 = scmp.eq.s32.totalorder %s26, 0
      %p74 = por %p72, %p73
      %s76 = sadd.s32 %s75, 1
      %p79 = scmp.eq.s32.totalorder %s20, 1
      %p80 = scmp.ne.s32.totalorder %s75, %s77
      %p81 = scmp.eq.s32.totalorder %s20, 0
      %p82 = por %p80, %p81
      %p83 = scmp.ne.s32.totalorder %s75, %s77
      %p84 = scmp.eq.s32.totalorder %s25, 1
      %p85 = por %p83, %p84
      %p86 = scmp.ne.s32.totalorder %s77, %s78
      %p87 = scmp.eq.s32.totalorder %s25, 0
      %p88 = por %p86, %p87
      %p89 = scmp.ne.s32.totalorder %s77, %s78
      %p90 = scmp.eq.s32.totalorder %s26, 1
      %p91 = por %p89, %p90
      %p93 = scmp.ne.s32.totalorder %s78, %s92
      %p94 = scmp.eq.s32.totalorder %s26, 0
      %p95 = por %p93, %p94
      %s97 = sadd.s32 %s96, 1
      %p100 = scmp.eq.s32.totalorder %s20, 1
      %p101 = scmp.ne.s32.totalorder %s96, %s98
      %p102 = scmp.eq.s32.totalorder %s20, 0
      %p103 = por %p101, %p102
      %p104 = scmp.ne.s32.totalorder %s96, %s98
      %p105 = scmp.eq.s32.totalorder %s25, 1
      %p106 = por %p104, %p105
      %p107 = scmp.ne.s32.totalorder %s98, %s99
      %p108 = scmp.eq.s32.totalorder %s25, 0
      %p109 = por %p107, %p108
      %p110 = scmp.ne.s32.totalorder %s98, %s99
      %p111 = scmp.eq.s32.totalorder %s26, 1
      %p112 = por %p110, %p111
      %p114 = scmp.ne.s32.totalorder %s99, %s113
      %p115 = scmp.eq.s32.totalorder %s26, 0
      %p116 = por %p114, %p115
      %s118 = sadd.s32 %s117, 1
      %p121 = scmp.eq.s32.totalorder %s20, 1
      %p122 = scmp.ne.s32.totalorder %s117, %s119
      %p123 = scmp.eq.s32.totalorder %s20, 0
      %p124 = por %p122, %p123
      %p125 = scmp.ne.s32.totalorder %s117, %s119
      %p126 = scmp.eq.s32.totalorder %s25, 1
      %p127 = por %p125, %p126
      %p128 = scmp.ne.s32.totalorder %s119, %s120
      %p129 = scmp.eq.s32.totalorder %s25, 0
      %p130 = por %p128, %p129
      %p131 = scmp.ne.s32.totalorder %s119, %s120
      %p132 = scmp.eq.s32.totalorder %s26, 1
      %p133 = por %p131, %p132
      %p135 = scmp.ne.s32.totalorder %s120, %s134
      %p136 = scmp.eq.s32.totalorder %s26, 0
      %p137 = por %p135, %p136
      %s139 = sadd.s32 %s138, 1
      %p142 = scmp.eq.s32.totalorder %s20, 1
      %p143 = scmp.ne.s32.totalorder %s138, %s140
      %p144 = scmp.eq.s32.totalorder %s20, 0
      %p145 = por %p143, %p144
      %p146 = scmp.ne.s32.totalorder %s138, %s140
      %p147 = scmp.eq.s32.totalorder %s25, 1
      %p148 = por %p146, %p147
      %p149 = scmp.ne.s32.totalorder %s140, %s141
      %p150 = scmp.eq.s32.totalorder %s25, 0
      %p151 = por %p149, %p150
      %p152 = scmp.ne.s32.totalorder %s140, %s141
      %p153 = scmp.eq.s32.totalorder %s26, 1
      %p154 = por %p152, %p153
      %p156 = scmp.ne.s32.totalorder %s141, %s155
      %p157 = scmp.eq.s32.totalorder %s26, 0
      %p158 = por %p156, %p157
      %s160 = sadd.s32 %s159, 1
      %p163 = scmp.eq.s32.totalorder %s20, 1
      %p164 = scmp.ne.s32.totalorder %s159, %s161
      %p165 = scmp.eq.s32.totalorder %s20, 0
      %p166 = por %p164, %p165
      %p167 = scmp.ne.s32.totalorder %s159, %s161
      %p168 = scmp.eq.s32.totalorder %s25, 1
      %p169 = por %p167, %p168
      %p170 = scmp.ne.s32.totalorder %s161, %s162
      %p171 = scmp.eq.s32.totalorder %s25, 0
      %p172 = por %p170, %p171
      %p173 = scmp.ne.s32.totalorder %s161, %s162
      %p174 = scmp.eq.s32.totalorder %s26, 1
      %p175 = por %p173, %p174
      %p177 = scmp.ne.s32.totalorder %s162, %s176
      %p178 = scmp.eq.s32.totalorder %s26, 0
      %p179 = por %p177, %p178
      %s180 = ssub.s32 %s20, %s27
      %p181 = scmp.eq.s32.totalorder %s180, 0
      %s183 = sadd.s32 %s182, 1
      %s184 = scalar_select %p181, %s182, %s183
      %p187 = pneg %p181
      %p188 = scmp.eq.s32.totalorder %s20, 1
      %p189 = por %p187, %p188
      %p190 = scmp.ne.s32.totalorder %s182, %s185
      %p191 = scmp.eq.s32.totalorder %s20, 0
      %p192 = por %p190, %p191
      %p193 = scmp.ne.s32.totalorder %s182, %s185
      %p194 = scmp.eq.s32.totalorder %s25, 1
      %p195 = por %p193, %p194
      %p196 = scmp.ne.s32.totalorder %s185, %s186
      %p197 = scmp.eq.s32.totalorder %s25, 0
      %p198 = por %p196, %p197
      %p199 = scmp.ne.s32.totalorder %s185, %s186
      %p200 = scmp.eq.s32.totalorder %s26, 1
      %p201 = por %p199, %p200
      %p203 = scmp.ne.s32.totalorder %s186, %s202
      %p204 = scmp.eq.s32.totalorder %s26, 0
      %p205 = por %p203, %p204
      %p206 = scmp.le.s32.totalorder 1, %s20
      %p207 = scmp.lt.s32.totalorder %s20, 3
      %p208 = pnand %p206, %p207
      %p209 = pneg %p208
      // Predicated region
      $region9: #{tpu_custom_call.1} parent=5 // pred_check
        _
      $region10: #{tpu_custom_call.1} parent=5 // pred_check_branch
        %211 = sbr.rel (%p208) target = $region12
      $region11: #{tpu_custom_call.1} parent=5 // pred_region
        %s212 = ssub.s32 %s20, 1
        // Predicated region
        $region13: #{tpu_custom_call.1} parent=11 // pred_check
          %p213 = pneg %p67
        $region14: #{tpu_custom_call.1} parent=11 // pred_check_branch
          %215 = sbr.rel (%p213) target = $region16
        $region15: #{tpu_custom_call.1} parent=11 // pred_region
          %s217 = ssub.s32 1536, 1536
          %218 = vsyncadd [#allocation6], %s217
          %s219 = sshll.u32 [#allocation5], 4
          %s220 = int_to_ptr.vmem [resolvable:$true] %s219
          %225 = dma.hbm_to_vmem [thread:$0]  %s1, 1536, %s220, [#allocation6], 64, 64, 4
        $region16: #{tpu_custom_call.1} parent=11 // pred_fallthru
          _
        // Predicated region
        $region17: #{tpu_custom_call.1} parent=11 // pred_check
          %p226 = pneg %p88
        $region18: #{tpu_custom_call.1} parent=11 // pred_check_branch
          %228 = sbr.rel (%p226) target = $region20
        $region19: #{tpu_custom_call.1} parent=11 // pred_region
          %s230 = ssub.s32 1536, 1536
          %231 = vsyncadd [#allocation6], %s230
          %s232 = sshll.u32 [#allocation7], 4
          %s233 = int_to_ptr.vmem [resolvable:$true] %s232
          %238 = dma.hbm_to_vmem [thread:$0]  %s2, 1536, %s233, [#allocation6], 64, 64, 4
        $region20: #{tpu_custom_call.1} parent=11 // pred_fallthru
          _
        // Predicated region
        $region21: #{tpu_custom_call.1} parent=11 // pred_check
          %p239 = pneg %p109
        $region22: #{tpu_custom_call.1} parent=11 // pred_check_branch
          %241 = sbr.rel (%p239) target = $region24
        $region23: #{tpu_custom_call.1} parent=11 // pred_region
          _
        $region24: #{tpu_custom_call.1} parent=11 // pred_fallthru
          _
        // Predicated region
        $region25: #{tpu_custom_call.1} parent=11 // pred_check
          %p242 = pneg %p130
        $region26: #{tpu_custom_call.1} parent=11 // pred_check_branch
          %244 = sbr.rel (%p242) target = $region28
        $region27: #{tpu_custom_call.1} parent=11 // pred_region
          _
        $region28: #{tpu_custom_call.1} parent=11 // pred_fallthru
          _
        // Predicated region
        $region29: #{tpu_custom_call.1} parent=11 // pred_check
          %p245 = pneg %p151
        $region30: #{tpu_custom_call.1} parent=11 // pred_check_branch
          %247 = sbr.rel (%p245) target = $region32
        $region31: #{tpu_custom_call.1} parent=11 // pred_region
          _
        $region32: #{tpu_custom_call.1} parent=11 // pred_fallthru
          _
        // Predicated region
        $region33: #{tpu_custom_call.1} parent=11 // pred_check
          %p248 = pneg %p172
        $region34: #{tpu_custom_call.1} parent=11 // pred_check_branch
          %250 = sbr.rel (%p248) target = $region36
        $region35: #{tpu_custom_call.1} parent=11 // pred_region
          _
        $region36: #{tpu_custom_call.1} parent=11 // pred_fallthru
          _
      $region12: #{tpu_custom_call.1} parent=5 // pred_fallthru
        _
      %p251 = scmp.lt.s32.totalorder %s20, 2
      // Predicated region
      $region37: #{tpu_custom_call.1} parent=5 // pred_check
        %p252 = pneg %p251
      $region38: #{tpu_custom_call.1} parent=5 // pred_check_branch
        %254 = sbr.rel (%p252) target = $region40
      $region39: #{tpu_custom_call.1} parent=5 // pred_region
        // Predicated region
        $region41: #{tpu_custom_call.1} parent=39 // pred_check
          %p255 = pneg %p40
        $region42: #{tpu_custom_call.1} parent=39 // pred_check_branch
          %257 = sbr.rel (%p255) target = $region44
        $region43: #{tpu_custom_call.1} parent=39 // pred_region
          %s258 = sand.u32 %s30, 1
          %s259 = scalar_lea.sflag [#allocation3], %s258
          %s260 = sand.u32 %s30, 1
          %s261 = smul.addr %s260, 16
          %s262 = scalar_lea.vmem [#allocation2], %s261
          %s264 = ssub.s32 256, 256
          %265 = vsyncadd %s259, %s264
          %s266 = smul.addr %s20, 2
          %s267 = smul.addr %s266, 128
          %s268 = scalar_lea.hbm %s0, %s267
          %s269 = sshll.u32 %s262, 4
          %s270 = int_to_ptr.vmem [resolvable:$true] %s269
          %275 = dma.hbm_to_vmem [thread:$0]  %s268, 256, %s270, %s259, 128, 128, 8
        $region44: #{tpu_custom_call.1} parent=39 // pred_fallthru
          _
      $region40: #{tpu_custom_call.1} parent=5 // pred_fallthru
        _
      %p276 = scmp.le.s32.totalorder 1, %s20
      %p277 = scmp.lt.s32.totalorder %s20, 3
      %p278 = pnand %p276, %p277
      %p279 = pneg %p278
      // Predicated region
      $region45: #{tpu_custom_call.1} parent=5 // pred_check
        _
      $region46: #{tpu_custom_call.1} parent=5 // pred_check_branch
        %281 = sbr.rel (%p278) target = $region48
      $region47: #{tpu_custom_call.1} parent=5 // pred_region
        %s282 = ssub.s32 %s20, 1
        %s283 = sand.u32 %s33, 1
        %s284 = scalar_lea.sflag [#allocation3], %s283
        %s285 = sand.u32 %s33, 1
        %s286 = smul.addr %s285, 16
        %s287 = scalar_lea.vmem [#allocation2], %s286
        // Predicated region
        $region49: #{tpu_custom_call.1} parent=47 // pred_check
          %p288 = pneg %p46
        $region50: #{tpu_custom_call.1} parent=47 // pred_check_branch
          %290 = sbr.rel (%p288) target = $region52
        $region51: #{tpu_custom_call.1} parent=47 // pred_region
          %291 = dma.done %s284, 256
        $region52: #{tpu_custom_call.1} parent=47 // pred_fallthru
          _
        // Predicated region
        $region53: #{tpu_custom_call.1} parent=47 // pred_check
          %p292 = pneg %p67
        $region54: #{tpu_custom_call.1} parent=47 // pred_check_branch
          %294 = sbr.rel (%p292) target = $region56
        $region55: #{tpu_custom_call.1} parent=47 // pred_region
          %295 = dma.done [#allocation6], 1536
        $region56: #{tpu_custom_call.1} parent=47 // pred_fallthru
          _
        // Predicated region
        $region57: #{tpu_custom_call.1} parent=47 // pred_check
          %p296 = pneg %p88
        $region58: #{tpu_custom_call.1} parent=47 // pred_check_branch
          %298 = sbr.rel (%p296) target = $region60
        $region59: #{tpu_custom_call.1} parent=47 // pred_region
          %299 = dma.done [#allocation6], 1536
        $region60: #{tpu_custom_call.1} parent=47 // pred_fallthru
          _
        %s300 = sand.u32 %s33, 1
        %s301 = scalar_lea.sflag [#allocation3], %s300
        %s302 = sand.u32 %s33, 1
        %s303 = smul.addr %s302, 16
        %s304 = scalar_lea.vmem [#allocation2], %s303
        %p305 = pneg %p46
        %p306 = pneg %p43
        %p307 = pneg %p67
        %p308 = pneg %p64
        %p309 = pneg %p88
        %p310 = pneg %p85
        %p311 = pneg %p109
        %p312 = pneg %p106
        %p313 = pneg %p130
        %p314 = pneg %p127
        %p315 = pneg %p151
        %p316 = pneg %p148
        %p317 = pneg %p172
        %p318 = pneg %p169
        %p319 = pneg %p198
        %p320 = pneg %p195
        %s321 = sand.u32 %s185, 1
        %s322 = scalar_lea.sflag [#allocation4], %s321
        %s323 = sand.u32 %s185, 1
        %s324 = smul.addr %s323, 16
        %s325 = scalar_lea.vmem [#allocation8], %s324
        %v327 = vld [vmem:[%s287] sm:$0xff]
        %v328 = vld [vmem:[%s287 + $0x8] sm:$0xff]
        %v329 = vpack.c.bf16 %v328, %v327
        %vm332 = vcmask 1040384
        %v333 = vrot.slane %v327, 7
        %v334 = vrot.slane %v328, 7
        %v335 = vsel %vm332, %v333, %v334
        %v338 = vsel %vm332, 0.0, %v333
        %v339 = vpack.c.bf16 %v335, %v338
        %vm340 = vcmask 1046528
        %v341 = vrot.slane %v327, 1
        %v342 = vrot.slane %v328, 1
        %v343 = vsel %vm340, %v341, %v342
        %v346 = vsel %vm340, %v342, 0.0
        %v347 = vpack.c.bf16 %v346, %v343
        %v348 = vld [vmem:[#allocation5] sm:$0xf]
        %v349 = vld [vmem:[#allocation5 + $0x4] sm:$0xf]
        %v350 = vld [vmem:[#allocation5 + $0x8] sm:$0xf]
        %v351 = vld [vmem:[#allocation5 + $0xc] sm:$0xf]
        %v352 = vld [vmem:[#allocation5 + $0x10] sm:$0xf]
        %v353 = vld [vmem:[#allocation5 + $0x14] sm:$0xf]
        %v354 = vld [vmem:[#allocation5 + $0x18] sm:$0xf]
        %v355 = vld [vmem:[#allocation5 + $0x1c] sm:$0xf]
        %s356 = scalar_lea.vmem [#allocation5], 32
        %v357 = vld [vmem:[%s356] sm:$0xf]
        %v358 = vld [vmem:[%s356 + $0x4] sm:$0xf]
        %v359 = vld [vmem:[%s356 + $0x8] sm:$0xf]
        %v360 = vld [vmem:[%s356 + $0xc] sm:$0xf]
        %v361 = vld [vmem:[%s356 + $0x10] sm:$0xf]
        %v362 = vld [vmem:[%s356 + $0x14] sm:$0xf]
        %v363 = vld [vmem:[%s356 + $0x18] sm:$0xf]
        %v364 = vld [vmem:[%s356 + $0x1c] sm:$0xf]
        %v373 = vunpack.c.l.b16 %v357
        %v374 = vunpack.c.l.b16 %v358
        %v375 = vunpack.c.l.b16 %v359
        %v376 = vunpack.c.l.b16 %v360
        %v377 = vunpack.c.l.b16 %v361
        %v378 = vunpack.c.l.b16 %v362
        %v379 = vunpack.c.l.b16 %v363
        %v380 = vunpack.c.l.b16 %v364
        %v381 = vpack.c.b16 %v374, %v373
        %v382 = vpack.c.b16 %v376, %v375
        %v383 = vpack.c.b16 %v378, %v377
        %v384 = vpack.c.b16 %v380, %v379
        %vm389 = vcmask 523264
        %v391 = vsel %vm389, %v329, 0
        %393 = vmatprep.subr.bf16.mxu0 0
        %394 = vmatpush1.bf16.msra.mxu0 %v381
        %395 = vmatprep.subr.bf16.mxu0 0
        %396 = vmatpush1.bf16.msra.mxu0 %v382
        %397 = vmatprep.subr.bf16.mxu0 0
        %398 = vmatpush1.bf16.msra.mxu0 %v383
        %399 = vmatprep.subr.bf16.mxu0 0
        %400 = vmatpush1.bf16.msra.mxu0 %v384
        %401 = vmatprep.subr.bf16.mxu0 0
        %402 = vmatpush1.bf16.msra.mxu0 0
        %403 = vmatprep.subr.bf16.mxu0 0
        %404 = vmatpush1.bf16.msra.mxu0 0
        %405 = vmatprep.subr.bf16.mxu0 0
        %406 = vmatpush1.bf16.msra.mxu0 0
        %407 = vmatprep.subr.bf16.mxu0 0
        %408 = vmatpush1.bf16.msra.mxu0 0
        %409 = vmatprep.subr.bf16.mxu0 0
        %410 = vmatpush1.bf16.msra.mxu0 0
        %411 = vmatprep.subr.bf16.mxu0 0
        %412 = vmatpush1.bf16.msra.mxu0 0
        %413 = vmatprep.subr.bf16.mxu0 0
        %414 = vmatpush1.bf16.msra.mxu0 0
        %415 = vmatprep.subr.bf16.mxu0 0
        %416 = vmatpush1.bf16.msra.mxu0 0
        %417 = vmatprep.subr.bf16.mxu0 0
        %418 = vmatpush1.bf16.msra.mxu0 0
        %419 = vmatprep.subr.bf16.mxu0 0
        %420 = vmatpush1.bf16.msra.mxu0 0
        %421 = vmatprep.subr.bf16.mxu0 0
        %422 = vmatpush1.bf16.msra.mxu0 0
        %423 = vmatprep.subr.bf16.mxu0 0
        %424 = vmatpush1.bf16.msra.mxu0 0
        %425 = vmatprep.mubr.bf16.mxu0 0
        %426 = vmatmul.mubr.bf16.gmra.mrb[0].mxu0 %v391
        %v427 = vpop.f32.mrb[0].mxu0
        %v428 = vadd.f32 0.0, %v427
        %v429 = vpop.f32.mrb[0].mxu0
        %v430 = vpop.f32.mrb[0].mxu0
        %v431 = vadd.f32 0.0, %v430
        %v432 = vpop.f32.mrb[0].mxu0
        %433 = vdwg.mxu0
        %v442 = vunpack.c.l.b16 %v348
        %v443 = vunpack.c.l.b16 %v349
        %v444 = vunpack.c.l.b16 %v350
        %v445 = vunpack.c.l.b16 %v351
        %v446 = vunpack.c.l.b16 %v352
        %v447 = vunpack.c.l.b16 %v353
        %v448 = vunpack.c.l.b16 %v354
        %v449 = vunpack.c.l.b16 %v355
        %v450 = vpack.c.b16 %v443, %v442
        %v451 = vpack.c.b16 %v445, %v444
        %v452 = vpack.c.b16 %v447, %v446
        %v453 = vpack.c.b16 %v449, %v448
        %v459 = vsel %vm389, %v339, 0
        %461 = vmatprep.subr.bf16.mxu0 0
        %462 = vmatpush1.bf16.msra.mxu0 %v450
        %463 = vmatprep.subr.bf16.mxu0 0
        %464 = vmatpush1.bf16.msra.mxu0 %v451
        %465 = vmatprep.subr.bf16.mxu0 0
        %466 = vmatpush1.bf16.msra.mxu0 %v452
        %467 = vmatprep.subr.bf16.mxu0 0
        %468 = vmatpush1.bf16.msra.mxu0 %v453
        %469 = vmatprep.subr.bf16.mxu0 0
        %470 = vmatpush1.bf16.msra.mxu0 0
        %471 = vmatprep.subr.bf16.mxu0 0
        %472 = vmatpush1.bf16.msra.mxu0 0
        %473 = vmatprep.subr.bf16.mxu0 0
        %474 = vmatpush1.bf16.msra.mxu0 0
        %475 = vmatprep.subr.bf16.mxu0 0
        %476 = vmatpush1.bf16.msra.mxu0 0
        %477 = vmatprep.subr.bf16.mxu0 0
        %478 = vmatpush1.bf16.msra.mxu0 0
        %479 = vmatprep.subr.bf16.mxu0 0
        %480 = vmatpush1.bf16.msra.mxu0 0
        %481 = vmatprep.subr.bf16.mxu0 0
        %482 = vmatpush1.bf16.msra.mxu0 0
        %483 = vmatprep.subr.bf16.mxu0 0
        %484 = vmatpush1.bf16.msra.mxu0 0
        %485 = vmatprep.subr.bf16.mxu0 0
        %486 = vmatpush1.bf16.msra.mxu0 0
        %487 = vmatprep.subr.bf16.mxu0 0
        %488 = vmatpush1.bf16.msra.mxu0 0
        %489 = vmatprep.subr.bf16.mxu0 0
        %490 = vmatpush1.bf16.msra.mxu0 0
        %491 = vmatprep.subr.bf16.mxu0 0
        %492 = vmatpush1.bf16.msra.mxu0 0
        %493 = vmatprep.mubr.bf16.mxu0 0
        %494 = vmatmul.mubr.bf16.gmra.mrb[0].mxu0 %v459
        %v495 = vpop.f32.mrb[0].mxu0
        %v496 = vadd.f32 %v428, %v495
        %v497 = vpop.f32.mrb[0].mxu0
        %v498 = vpop.f32.mrb[0].mxu0
        %v499 = vadd.f32 %v431, %v498
        %v500 = vpop.f32.mrb[0].mxu0
        %501 = vdwg.mxu0
        %s502 = scalar_lea.vmem [#allocation5], 64
        %v503 = vld [vmem:[%s502] sm:$0xf]
        %v504 = vld [vmem:[%s502 + $0x4] sm:$0xf]
        %v505 = vld [vmem:[%s502 + $0x8] sm:$0xf]
        %v506 = vld [vmem:[%s502 + $0xc] sm:$0xf]
        %v507 = vld [vmem:[%s502 + $0x10] sm:$0xf]
        %v508 = vld [vmem:[%s502 + $0x14] sm:$0xf]
        %v509 = vld [vmem:[%s502 + $0x18] sm:$0xf]
        %v510 = vld [vmem:[%s502 + $0x1c] sm:$0xf]
        %v519 = vunpack.c.l.b16 %v503
        %v520 = vunpack.c.l.b16 %v504
        %v521 = vunpack.c.l.b16 %v505
        %v522 = vunpack.c.l.b16 %v506
        %v523 = vunpack.c.l.b16 %v507
        %v524 = vunpack.c.l.b16 %v508
        %v525 = vunpack.c.l.b16 %v509
        %v526 = vunpack.c.l.b16 %v510
        %v527 = vpack.c.b16 %v520, %v519
        %v528 = vpack.c.b16 %v522, %v521
        %v529 = vpack.c.b16 %v524, %v523
        %v530 = vpack.c.b16 %v526, %v525
        %v536 = vsel %vm389, %v347, 0
        %538 = vmatprep.subr.bf16.mxu0 0
        %539 = vmatpush1.bf16.msra.mxu0 %v527
        %540 = vmatprep.subr.bf16.mxu0 0
        %541 = vmatpush1.bf16.msra.mxu0 %v528
        %542 = vmatprep.subr.bf16.mxu0 0
        %543 = vmatpush1.bf16.msra.mxu0 %v529
        %544 = vmatprep.subr.bf16.mxu0 0
        %545 = vmatpush1.bf16.msra.mxu0 %v530
        %546 = vmatprep.subr.bf16.mxu0 0
        %547 = vmatpush1.bf16.msra.mxu0 0
        %548 = vmatprep.subr.bf16.mxu0 0
        %549 = vmatpush1.bf16.msra.mxu0 0
        %550 = vmatprep.subr.bf16.mxu0 0
        %551 = vmatpush1.bf16.msra.mxu0 0
        %552 = vmatprep.subr.bf16.mxu0 0
        %553 = vmatpush1.bf16.msra.mxu0 0
        %554 = vmatprep.subr.bf16.mxu0 0
        %555 = vmatpush1.bf16.msra.mxu0 0
        %556 = vmatprep.subr.bf16.mxu0 0
        %557 = vmatpush1.bf16.msra.mxu0 0
        %558 = vmatprep.subr.bf16.mxu0 0
        %559 = vmatpush1.bf16.msra.mxu0 0
        %560 = vmatprep.subr.bf16.mxu0 0
        %561 = vmatpush1.bf16.msra.mxu0 0
        %562 = vmatprep.subr.bf16.mxu0 0
        %563 = vmatpush1.bf16.msra.mxu0 0
        %564 = vmatprep.subr.bf16.mxu0 0
        %565 = vmatpush1.bf16.msra.mxu0 0
        %566 = vmatprep.subr.bf16.mxu0 0
        %567 = vmatpush1.bf16.msra.mxu0 0
        %568 = vmatprep.subr.bf16.mxu0 0
        %569 = vmatpush1.bf16.msra.mxu0 0
        %570 = vmatprep.mubr.bf16.mxu0 0
        %571 = vmatmul.mubr.bf16.gmra.mrb[0].mxu0 %v536
        %v572 = vpop.f32.mrb[0].mxu0
        %v573 = vadd.f32 0.0, %v572
        %v574 = vpop.f32.mrb[0].mxu0
        %v575 = vpop.f32.mrb[0].mxu0
        %v576 = vadd.f32 0.0, %v575
        %v577 = vpop.f32.mrb[0].mxu0
        %578 = vdwg.mxu0
        %v579 = vadd.f32 %v496, %v573
        %v580 = vadd.f32 %v499, %v576
        %v581 = vld [vmem:[%s3] sm:$0x1]
        %v583 = vlaneseq
        %v584 = vshrl.u32 %v583, 7
        %v585 = vsub.s32 0, %v584
        %v586 = vrot.slane %v581, %v585
        %v588 = vmul.f32 %v579, %v586
        %v589 = vmul.f32 %v580, %v586
        %v590 = vld [vmem:[%s4] sm:$0x1]
        %v592 = vlaneseq
        %v593 = vshrl.u32 %v592, 7
        %v594 = vsub.s32 0, %v593
        %v595 = vrot.slane %v590, %v594
        %v597 = vadd.f32 %v588, %v595
        %v598 = vadd.f32 %v589, %v595
        %v599 = vmax.f32 %v597, 0.0
        %v600 = vmax.f32 %v598, 0.0
        %v601 = vpack.c.bf16 %v600, %v599
        %v604 = vrot.slane %v599, 7
        %v605 = vrot.slane %v600, 7
        %v606 = vsel %vm332, %v604, %v605
        %v609 = vsel %vm332, 0.0, %v604
        %v610 = vpack.c.bf16 %v606, %v609
        %v611 = vrot.slane %v599, 1
        %v612 = vrot.slane %v600, 1
        %v613 = vsel %vm340, %v611, %v612
        %v616 = vsel %vm340, %v612, 0.0
        %v617 = vpack.c.bf16 %v616, %v613
        %v618 = vld [vmem:[#allocation7] sm:$0xf]
        %v619 = vld [vmem:[#allocation7 + $0x4] sm:$0xf]
        %v620 = vld [vmem:[#allocation7 + $0x8] sm:$0xf]
        %v621 = vld [vmem:[#allocation7 + $0xc] sm:$0xf]
        %v622 = vld [vmem:[#allocation7 + $0x10] sm:$0xf]
        %v623 = vld [vmem:[#allocation7 + $0x14] sm:$0xf]
        %v624 = vld [vmem:[#allocation7 + $0x18] sm:$0xf]
        %v625 = vld [vmem:[#allocation7 + $0x1c] sm:$0xf]
        %s626 = scalar_lea.vmem [#allocation7], 32
        %v627 = vld [vmem:[%s626] sm:$0xf]
        %v628 = vld [vmem:[%s626 + $0x4] sm:$0xf]
        %v629 = vld [vmem:[%s626 + $0x8] sm:$0xf]
        %v630 = vld [vmem:[%s626 + $0xc] sm:$0xf]
        %v631 = vld [vmem:[%s626 + $0x10] sm:$0xf]
        %v632 = vld [vmem:[%s626 + $0x14] sm:$0xf]
        %v633 = vld [vmem:[%s626 + $0x18] sm:$0xf]
        %v634 = vld [vmem:[%s626 + $0x1c] sm:$0xf]
        %v643 = vunpack.c.l.b16 %v627
        %v644 = vunpack.c.l.b16 %v628
        %v645 = vunpack.c.l.b16 %v629
        %v646 = vunpack.c.l.b16 %v630
        %v647 = vunpack.c.l.b16 %v631
        %v648 = vunpack.c.l.b16 %v632
        %v649 = vunpack.c.l.b16 %v633
        %v650 = vunpack.c.l.b16 %v634
        %v651 = vpack.c.b16 %v644, %v643
        %v652 = vpack.c.b16 %v646, %v645
        %v653 = vpack.c.b16 %v648, %v647
        %v654 = vpack.c.b16 %v650, %v649
        %v660 = vsel %vm389, %v601, 0
        %662 = vmatprep.subr.bf16.mxu0 0
        %663 = vmatpush1.bf16.msra.mxu0 %v651
        %664 = vmatprep.subr.bf16.mxu0 0
        %665 = vmatpush1.bf16.msra.mxu0 %v652
        %666 = vmatprep.subr.bf16.mxu0 0
        %667 = vmatpush1.bf16.msra.mxu0 %v653
        %668 = vmatprep.subr.bf16.mxu0 0
        %669 = vmatpush1.bf16.msra.mxu0 %v654
        %670 = vmatprep.subr.bf16.mxu0 0
        %671 = vmatpush1.bf16.msra.mxu0 0
        %672 = vmatprep.subr.bf16.mxu0 0
        %673 = vmatpush1.bf16.msra.mxu0 0
        %674 = vmatprep.subr.bf16.mxu0 0
        %675 = vmatpush1.bf16.msra.mxu0 0
        %676 = vmatprep.subr.bf16.mxu0 0
        %677 = vmatpush1.bf16.msra.mxu0 0
        %678 = vmatprep.subr.bf16.mxu0 0
        %679 = vmatpush1.bf16.msra.mxu0 0
        %680 = vmatprep.subr.bf16.mxu0 0
        %681 = vmatpush1.bf16.msra.mxu0 0
        %682 = vmatprep.subr.bf16.mxu0 0
        %683 = vmatpush1.bf16.msra.mxu0 0
        %684 = vmatprep.subr.bf16.mxu0 0
        %685 = vmatpush1.bf16.msra.mxu0 0
        %686 = vmatprep.subr.bf16.mxu0 0
        %687 = vmatpush1.bf16.msra.mxu0 0
        %688 = vmatprep.subr.bf16.mxu0 0
        %689 = vmatpush1.bf16.msra.mxu0 0
        %690 = vmatprep.subr.bf16.mxu0 0
        %691 = vmatpush1.bf16.msra.mxu0 0
        %692 = vmatprep.subr.bf16.mxu0 0
        %693 = vmatpush1.bf16.msra.mxu0 0
        %694 = vmatprep.mubr.bf16.mxu0 0
        %695 = vmatmul.mubr.bf16.gmra.mrb[0].mxu0 %v660
        %v696 = vpop.f32.mrb[0].mxu0
        %v697 = vadd.f32 0.0, %v696
        %v698 = vpop.f32.mrb[0].mxu0
        %v699 = vpop.f32.mrb[0].mxu0
        %v700 = vadd.f32 0.0, %v699
        %v701 = vpop.f32.mrb[0].mxu0
        %702 = vdwg.mxu0
        %v711 = vunpack.c.l.b16 %v618
        %v712 = vunpack.c.l.b16 %v619
        %v713 = vunpack.c.l.b16 %v620
        %v714 = vunpack.c.l.b16 %v621
        %v715 = vunpack.c.l.b16 %v622
        %v716 = vunpack.c.l.b16 %v623
        %v717 = vunpack.c.l.b16 %v624
        %v718 = vunpack.c.l.b16 %v625
        %v719 = vpack.c.b16 %v712, %v711
        %v720 = vpack.c.b16 %v714, %v713
        %v721 = vpack.c.b16 %v716, %v715
        %v722 = vpack.c.b16 %v718, %v717
        %v728 = vsel %vm389, %v610, 0
        %730 = vmatprep.subr.bf16.mxu0 0
        %731 = vmatpush1.bf16.msra.mxu0 %v719
        %732 = vmatprep.subr.bf16.mxu0 0
        %733 = vmatpush1.bf16.msra.mxu0 %v720
        %734 = vmatprep.subr.bf16.mxu0 0
        %735 = vmatpush1.bf16.msra.mxu0 %v721
        %736 = vmatprep.subr.bf16.mxu0 0
        %737 = vmatpush1.bf16.msra.mxu0 %v722
        %738 = vmatprep.subr.bf16.mxu0 0
        %739 = vmatpush1.bf16.msra.mxu0 0
        %740 = vmatprep.subr.bf16.mxu0 0
        %741 = vmatpush1.bf16.msra.mxu0 0
        %742 = vmatprep.subr.bf16.mxu0 0
        %743 = vmatpush1.bf16.msra.mxu0 0
        %744 = vmatprep.subr.bf16.mxu0 0
        %745 = vmatpush1.bf16.msra.mxu0 0
        %746 = vmatprep.subr.bf16.mxu0 0
        %747 = vmatpush1.bf16.msra.mxu0 0
        %748 = vmatprep.subr.bf16.mxu0 0
        %749 = vmatpush1.bf16.msra.mxu0 0
        %750 = vmatprep.subr.bf16.mxu0 0
        %751 = vmatpush1.bf16.msra.mxu0 0
        %752 = vmatprep.subr.bf16.mxu0 0
        %753 = vmatpush1.bf16.msra.mxu0 0
        %754 = vmatprep.subr.bf16.mxu0 0
        %755 = vmatpush1.bf16.msra.mxu0 0
        %756 = vmatprep.subr.bf16.mxu0 0
        %757 = vmatpush1.bf16.msra.mxu0 0
        %758 = vmatprep.subr.bf16.mxu0 0
        %759 = vmatpush1.bf16.msra.mxu0 0
        %760 = vmatprep.subr.bf16.mxu0 0
        %761 = vmatpush1.bf16.msra.mxu0 0
        %762 = vmatprep.mubr.bf16.mxu0 0
        %763 = vmatmul.mubr.bf16.gmra.mrb[0].mxu0 %v728
        %v764 = vpop.f32.mrb[0].mxu0
        %v765 = vadd.f32 %v697, %v764
        %v766 = vpop.f32.mrb[0].mxu0
        %v767 = vpop.f32.mrb[0].mxu0
        %v768 = vadd.f32 %v700, %v767
        %v769 = vpop.f32.mrb[0].mxu0
        %770 = vdwg.mxu0
        %s771 = scalar_lea.vmem [#allocation7], 64
        %v772 = vld [vmem:[%s771] sm:$0xf]
        %v773 = vld [vmem:[%s771 + $0x4] sm:$0xf]
        %v774 = vld [vmem:[%s771 + $0x8] sm:$0xf]
        %v775 = vld [vmem:[%s771 + $0xc] sm:$0xf]
        %v776 = vld [vmem:[%s771 + $0x10] sm:$0xf]
        %v777 = vld [vmem:[%s771 + $0x14] sm:$0xf]
        %v778 = vld [vmem:[%s771 + $0x18] sm:$0xf]
        %v779 = vld [vmem:[%s771 + $0x1c] sm:$0xf]
        %v788 = vunpack.c.l.b16 %v772
        %v789 = vunpack.c.l.b16 %v773
        %v790 = vunpack.c.l.b16 %v774
        %v791 = vunpack.c.l.b16 %v775
        %v792 = vunpack.c.l.b16 %v776
        %v793 = vunpack.c.l.b16 %v777
        %v794 = vunpack.c.l.b16 %v778
        %v795 = vunpack.c.l.b16 %v779
        %v796 = vpack.c.b16 %v789, %v788
        %v797 = vpack.c.b16 %v791, %v790
        %v798 = vpack.c.b16 %v793, %v792
        %v799 = vpack.c.b16 %v795, %v794
        %v805 = vsel %vm389, %v617, 0
        %807 = vmatprep.subr.bf16.mxu0 0
        %808 = vmatpush1.bf16.msra.mxu0 %v796
        %809 = vmatprep.subr.bf16.mxu0 0
        %810 = vmatpush1.bf16.msra.mxu0 %v797
        %811 = vmatprep.subr.bf16.mxu0 0
        %812 = vmatpush1.bf16.msra.mxu0 %v798
        %813 = vmatprep.subr.bf16.mxu0 0
        %814 = vmatpush1.bf16.msra.mxu0 %v799
        %815 = vmatprep.subr.bf16.mxu0 0
        %816 = vmatpush1.bf16.msra.mxu0 0
        %817 = vmatprep.subr.bf16.mxu0 0
        %818 = vmatpush1.bf16.msra.mxu0 0
        %819 = vmatprep.subr.bf16.mxu0 0
        %820 = vmatpush1.bf16.msra.mxu0 0
        %821 = vmatprep.subr.bf16.mxu0 0
        %822 = vmatpush1.bf16.msra.mxu0 0
        %823 = vmatprep.subr.bf16.mxu0 0
        %824 = vmatpush1.bf16.msra.mxu0 0
        %825 = vmatprep.subr.bf16.mxu0 0
        %826 = vmatpush1.bf16.msra.mxu0 0
        %827 = vmatprep.subr.bf16.mxu0 0
        %828 = vmatpush1.bf16.msra.mxu0 0
        %829 = vmatprep.subr.bf16.mxu0 0
        %830 = vmatpush1.bf16.msra.mxu0 0
        %831 = vmatprep.subr.bf16.mxu0 0
        %832 = vmatpush1.bf16.msra.mxu0 0
        %833 = vmatprep.subr.bf16.mxu0 0
        %834 = vmatpush1.bf16.msra.mxu0 0
        %835 = vmatprep.subr.bf16.mxu0 0
        %836 = vmatpush1.bf16.msra.mxu0 0
        %837 = vmatprep.subr.bf16.mxu0 0
        %838 = vmatpush1.bf16.msra.mxu0 0
        %839 = vmatprep.mubr.bf16.mxu0 0
        %840 = vmatmul.mubr.bf16.gmra.mrb[0].mxu0 %v805
        %v841 = vpop.f32.mrb[0].mxu0
        %v842 = vadd.f32 0.0, %v841
        %v843 = vpop.f32.mrb[0].mxu0
        %v844 = vpop.f32.mrb[0].mxu0
        %v845 = vadd.f32 0.0, %v844
        %v846 = vpop.f32.mrb[0].mxu0
        %847 = vdwg.mxu0
        %v848 = vadd.f32 %v765, %v842
        %v849 = vadd.f32 %v768, %v845
        %v850 = vld [vmem:[%s5] sm:$0x1]
        %v852 = vlaneseq
        %v853 = vshrl.u32 %v852, 7
        %v854 = vsub.s32 0, %v853
        %v855 = vrot.slane %v850, %v854
        %v857 = vmul.f32 %v848, %v855
        %v858 = vmul.f32 %v849, %v855
        %v859 = vld [vmem:[%s6] sm:$0x1]
        %v861 = vlaneseq
        %v862 = vshrl.u32 %v861, 7
        %v863 = vsub.s32 0, %v862
        %v864 = vrot.slane %v859, %v863
        %v866 = vadd.f32 %v857, %v864
        %v867 = vadd.f32 %v858, %v864
        %v868 = vadd.f32 %v866, %v327
        %v869 = vadd.f32 %v867, %v328
        %v870 = vmax.f32 %v868, 0.0
        %v871 = vmax.f32 %v869, 0.0
        %872 = vst.msk [vmem:[%s325] sm:$0xff] %vm389, %v870
        %873 = vst.msk [vmem:[%s325 + $0x8] sm:$0xff] %vm389, %v871
        %s874 = sand.u32 %s185, 1
        %s875 = scalar_lea.sflag [#allocation4], %s874
        %s876 = sand.u32 %s185, 1
        %s877 = smul.addr %s876, 16
        %s878 = scalar_lea.vmem [#allocation8], %s877
        // Predicated region
        $region61: #{tpu_custom_call.1} parent=47 // pred_check
          %p879 = pneg %p195
        $region62: #{tpu_custom_call.1} parent=47 // pred_check_branch
          %881 = sbr.rel (%p879) target = $region64
        $region63: #{tpu_custom_call.1} parent=47 // pred_region
          %s883 = ssub.s32 256, 256
          %884 = vsyncadd %s875, %s883
          %s885 = smul.addr %s25, 2
          %s886 = smul.addr %s885, 128
          %s887 = scalar_lea.hbm %s7, %s886
          %s888 = sshll.u32 %s878, 4
          %s889 = int_to_ptr.vmem [resolvable:$true] %s888
          %894 = dma.vmem_to_hbm [thread:$0]  %s889, 256, %s887, %s875, 128, 128, 8
        $region64: #{tpu_custom_call.1} parent=47 // pred_fallthru
          _
      $region48: #{tpu_custom_call.1} parent=5 // pred_fallthru
        _
      %p895 = scmp.le.s32.totalorder 2, %s20
      // Predicated region
      $region65: #{tpu_custom_call.1} parent=5 // pred_check
        %p896 = pneg %p895
      $region66: #{tpu_custom_call.1} parent=5 // pred_check_branch
        %898 = sbr.rel (%p896) target = $region68
      $region67: #{tpu_custom_call.1} parent=5 // pred_region
        %s899 = ssub.s32 %s20, 2
        // Predicated region
        $region69: #{tpu_custom_call.1} parent=67 // pred_check
          %p900 = pneg %p201
        $region70: #{tpu_custom_call.1} parent=67 // pred_check_branch
          %902 = sbr.rel (%p900) target = $region72
        $region71: #{tpu_custom_call.1} parent=67 // pred_region
          %s903 = sand.u32 %s186, 1
          %s904 = scalar_lea.sflag [#allocation4], %s903
          %s905 = sand.u32 %s186, 1
          %s906 = smul.addr %s905, 16
          %s907 = scalar_lea.vmem [#allocation8], %s906
          %908 = dma.done %s904, 256
        $region72: #{tpu_custom_call.1} parent=67 // pred_fallthru
          _
      $region68: #{tpu_custom_call.1} parent=5 // pred_fallthru
        _
    $region6: #{tpu_custom_call.1} parent=1 // loop_footer
      %s24 = sadd.s32 1, %s20
    $region7: #{tpu_custom_call.1} parent=1 // loop_footer_branch
      %19 = sbr.rel target = $region3
    $region8: #{tpu_custom_call.1} parent=1 // loop_exit
      _
    %909 = vsyncpa [#allocation3], 1
    %s910 = scalar_lea.sflag [#allocation3], 1
    %911 = vsyncpa %s910, 1
    %912 = vsyncpa [#allocation6], 1
    %913 = vsyncpa [#allocation4], 1
    %s914 = scalar_lea.sflag [#allocation4], 1
    %915 = vsyncpa %s914, 1

</llo_original>
